<compile_context>
chip_gen: v6e
topology: v6e:2x2x1
jax: 0.10.0
libtpu: 0.0.40
codegen_flags: <defaults>
</compile_context>

<pallas_src>
import math
from functools import partial

import jax
import jax.numpy as jnp
from jax import lax
from jax.experimental import pallas as pl
from jax.experimental.pallas import tpu as pltpu


# ----------------------------- small helpers ---------------------------------

def _round_up(n, m):
    return -(-n // m) * m


def _padded_bytes(shape, dtype):
    """VMEM bytes for `shape` after (8, 128) tile padding of the last two dims."""
    s = list(shape)
    if len(s) >= 1:
        s[-1] = _round_up(s[-1], 128)
    if len(s) >= 2:
        s[-2] = _round_up(s[-2], 8)
    n = 1
    for d in s:
        n *= d
    return n * jnp.dtype(dtype).itemsize


def _clamp(v, lo, hi):
    return int(min(max(v, lo), hi))


def _pick_tile(n, target):
    """Largest tile <= target that divides n (prefer multiples of 8 when < n)."""
    if n <= target:
        return n
    for t in range(target, 0, -1):
        if n % t == 0 and t % 8 == 0:
            return t
    return n


# --------------------- kernel 1: QKV projection + head split ------------------

def _qkv_head_split_kernel(x_ref, wattn_ref, battn_ref, q_ref, present_ref, *,
                           sm_scale):
    # x_ref:       (1, tt, C)        f32   one (batch, row-tile) per grid step
    # wattn_ref:   (C, 3C)           bf16  VMEM-resident (single copy, not double-buffered)
    # battn_ref:   (1, 3C)           f32   VMEM-resident
    # q_ref:       (1, H, tt, hd)    bf16  head-split query, pre-scaled by 1/sqrt(hd)
    # present_ref: (2, 1, H, tt, hd) f32   (key, value) in the module's `present` layout
    x = x_ref[0]                                                  # (tt, C)
    _, H, tt, hd = q_ref.shape
    C = H * hd

    # One fused lane-dense QKV matmul: full contraction depth C on the MXU.
    qkv = jnp.dot(x.astype(jnp.bfloat16), wattn_ref[...],
                  preferred_element_type=jnp.float32)             # (tt, 3C) f32
    qkv = qkv + battn_ref[...]                                    # bias broadcast (1, 3C)

    # Head split happens ONCE here (outside the attention loop), so the flash kernel
    # never touches sub-128 lane slices.  The hd-wide slices below are the unavoidable
    # lane -> head-major relayout the (2, B, H, T, hd) `present` format requires;
    # total cost is a single O(B*T*C) pass.
    for h in range(H):
        lo = h * hd
        q_ref[0, h] = (qkv[:, lo:lo + hd] * sm_scale).astype(q_ref.dtype)
        present_ref[0, 0, h] = qkv[:, C + lo:C + lo + hd].astype(present_ref.dtype)
        present_ref[1, 0, h] = qkv[:, 2 * C + lo:2 * C + lo + hd].astype(present_ref.dtype)


# ----------- kernel 2: flash attention (online softmax) + fused c_proj --------

def _flash_attn_cproj_kernel(q_ref, kv_ref, wproj_ref, bproj_ref, out_ref,
                             m_scr, l_scr, acc_scr):
    # q_ref:   (1, H, tq, hd)     bf16  pre-scaled q, all heads of one q tile
    # kv_ref:  (2, 1, H, tk, hd)  f32   (key, value) tile read straight from `present`
    # wproj:   (C, C)             bf16  VMEM-resident
    # bproj:   (1, C)             f32   VMEM-resident
    # out_ref: (1, tq, C)         f32   resident across the kv ("arbitrary") axis
    # scratch: m (H,tq,1), l (H,tq,1), acc (H,tq,hd)  f32  online-softmax state
    qi = pl.program_id(1)
    ki = pl.program_id(2)
    _, H, tq, hd = q_ref.shape
    tk = kv_ref.shape[3]

    @pl.when(ki == 0)
    def _init():
        m_scr[...] = jnp.full(m_scr.shape, -jnp.inf, jnp.float32)
        l_scr[...] = jnp.zeros(l_scr.shape, jnp.float32)
        acc_scr[...] = jnp.zeros(acc_scr.shape, jnp.float32)

    # Causal block skip: this kv tile lies entirely above the diagonal for every
    # query row of the tile -> no compute (saves ~half the score FLOPs overall).
    @pl.when(ki * tk <= qi * tq + (tq - 1))
    def _compute():
        q = q_ref[0]                                              # (H, tq, hd) bf16
        k = kv_ref[0, 0].astype(jnp.bfloat16)                     # (H, tk, hd)
        v = kv_ref[1, 0].astype(jnp.bfloat16)

        # Scores for all heads in one batched MXU contraction: 'hqd,hkd->hqk'.
        s = lax.dot_general(q, k, (((2,), (2,)), ((0,), (0,))),
                            preferred_element_type=jnp.float32)   # (H, tq, tk) f32

        # Causal mask in f32 (matches torch's `w*b - 1e10*(1-b)` exactly).
        row = qi * tq + lax.broadcasted_iota(jnp.int32, (tq, tk), 0)
        col = ki * tk + lax.broadcasted_iota(jnp.int32, (tq, tk), 1)
        s = jnp.where((col <= row)[None, :, :], s, -1e10)

        # Online softmax update (f32 VPU/EUP math; bf16 only as an MXU operand).
        m_prev = m_scr[...]
        m_new = jnp.maximum(m_prev, jnp.max(s, axis=-1, keepdims=True))
        alpha = jnp.exp(m_prev - m_new)
        p = jnp.exp(s - m_new)                     # reuses s; no extra f32 tiles kept live
        l_scr[...] = alpha * l_scr[...] + jnp.sum(p, axis=-1, keepdims=True)
        pv = lax.dot_general(p.astype(jnp.bfloat16), v,
                             (((2,), (1,)), ((0,), (0,))),
                             preferred_element_type=jnp.float32)  # (H, tq, hd)
        acc_scr[...] = alpha * acc_scr[...] + pv
        m_scr[...] = m_new

    @pl.when(ki == pl.num_programs(2) - 1)
    def _epilogue():
        o = acc_scr[...] * pl.reciprocal(l_scr[...], approx=True)  # (H, tq, hd) f32
        # merge_heads fused into c_proj: concatenate heads along lanes (cheap, once per
        # q tile) and run ONE (tq, C) @ (C, C) matmul at full contraction depth C.
        o_merged = jnp.concatenate([o[h] for h in range(H)], axis=-1)  # (tq, C)
        out = jnp.dot(o_merged.astype(jnp.bfloat16), wproj_ref[...],
                      preferred_element_type=jnp.float32)
        out = out + bproj_ref[...]                                 # (tq, C) + (1, C)
        out_ref[0] = out.astype(out_ref.dtype)


# --------------------------------- wrapper ------------------------------------

def attention_forward(x, w_attn, b_attn, w_proj, b_proj, *, n_head,
                      q_tile=128, kv_tile=256, proj_tile=256):
    """GPT-2 causal self-attention forward (eval mode, layer_past=None).

    x: (B, T, C); weights stored [in, out] (torch weight transposed).
    Returns (a, present) with a: (B, T, C), present: (2, B, H, T, C//H).
    """
    B, T, C = x.shape
    H = n_head
    assert C % H == 0
    hd = C // H

    tq = _pick_tile(T, q_tile)     # per-generation tuning knobs: multiples of 128;
    tk = _pick_tile(T, kv_tile)    # larger kv tiles pay off on v5e/v6e (128 MiB VMEM)
    tt = _pick_tile(T, proj_tile)
    num_q, num_kv, num_t = T // tq, T // tk, T // tt

    f32, bf16 = jnp.float32, jnp.bfloat16
    w_attn_bf16 = w_attn.astype(bf16)          # (C, 3C)
    w_proj_bf16 = w_proj.astype(bf16)          # (C, C)
    sm_scale = 1.0 / math.sqrt(hd)

    weight_spec = pl.BlockSpec(memory_space=pltpu.MemorySpace.VMEM)

    # ---- honest VMEM budgets: resident weights + double-buffered blocks + scratch +
    # ---- in-kernel temporaries, all (8,128)-tile padded; clamped <= 48 MiB (v7x-safe).
    k1_vmem = _clamp(
        _padded_bytes((C, 3 * C), bf16) + _padded_bytes((1, 3 * C), f32)   # resident W/b
        + 2 * (_padded_bytes((tt, C), f32)                                  # x block
               + _padded_bytes((H, tt, hd), bf16)                           # q block
               + _padded_bytes((2, H, tt, hd), f32))                        # present block
        + 2 * (_padded_bytes((tt, 3 * C), f32)                              # qkv temp
               + _padded_bytes((tt, C), bf16)),                             # x bf16 copy
        16 << 20, 48 << 20)

    k2_vmem = _clamp(
        _padded_bytes((C, C), bf16) + _padded_bytes((1, C), f32)            # resident W/b
        + 2 * (_padded_bytes((H, tq, hd), bf16)                             # q block
               + _padded_bytes((2, H, tk, hd), f32)                         # kv block
               + _padded_bytes((tq, C), f32))                               # out block
        + 2 * _padded_bytes((H, tq, 1), f32) + _padded_bytes((H, tq, hd), f32)  # m/l/acc
        + 2 * (2 * _padded_bytes((H, tq, tk), f32)                          # s, p
               + _padded_bytes((H, tq, tk), bf16)                           # p bf16
               + 2 * _padded_bytes((H, tk, hd), bf16)                       # k/v bf16
               + _padded_bytes((H, tq, hd), f32)                            # pv
               + 2 * _padded_bytes((tq, C), f32)),                          # merged o / out
        16 << 20, 48 << 20)

    # ---- kernel 1: QKV projection + one-time head split -------------------------------
    q_heads, present = pl.pallas_call(
        partial(_qkv_head_split_kernel, sm_scale=sm_scale),
        out_shape=(
            jax.ShapeDtypeStruct((B, H, T, hd), bf16),          # pre-scaled, head-split q
            jax.ShapeDtypeStruct((2, B, H, T, hd), x.dtype),    # module `present` + K/V source
        ),
        grid=(B, num_t),
        in_specs=[
            pl.BlockSpec((1, tt, C), lambda b, t: (b, t, 0)),
            weight_spec,   # c_attn weight (bf16, single-buffered VMEM resident)
            weight_spec,   # c_attn bias
        ],
        out_specs=(
            pl.BlockSpec((1, H, tt, hd), lambda b, t: (b, 0, t, 0)),
            pl.BlockSpec((2, 1, H, tt, hd), lambda b, t: (0, b, 0, t, 0)),
        ),
        compiler_params=pltpu.CompilerParams(
            dimension_semantics=("parallel", "parallel"),
            vmem_limit_bytes=k1_vmem),
    )(x, w_attn_bf16, b_attn)

    # ---- kernel 2: flash attention over kv tiles + fused merge_heads/c_proj -----------
    a = pl.pallas_call(
        _flash_attn_cproj_kernel,
        out_shape=jax.ShapeDtypeStruct((B, T, C), x.dtype),
        grid=(B, num_q, num_kv),
        in_specs=[
            pl.BlockSpec((1, H, tq, hd), lambda b, qi, ki: (b, 0, qi, 0)),
            pl.BlockSpec((2, 1, H, tk, hd), lambda b, qi, ki: (0, b, 0, ki, 0)),
            weight_spec,   # c_proj weight (bf16)
            weight_spec,   # c_proj bias
        ],
        out_specs=pl.BlockSpec((1, tq, C), lambda b, qi, ki: (b, qi, 0)),
        scratch_shapes=[
            pltpu.VMEM((H, tq, 1), f32),    # m: running row max
            pltpu.VMEM((H, tq, 1), f32),    # l: running denominator
            pltpu.VMEM((H, tq, hd), f32),   # acc: running PV
        ],
        compiler_params=pltpu.CompilerParams(
            dimension_semantics=("parallel", "parallel", "arbitrary"),
            vmem_limit_bytes=k2_vmem),
    )(q_heads, present, w_proj_bf16, b_proj)

    # dropout: eval-mode identity.
    return a, present


# --------------------------------- reference ----------------------------------

def _reference(x, w_attn, b_attn, w_proj, b_proj, n_head):
    """Pure-JAX f32 reference mirroring the PyTorch forward (eval mode)."""
    B, T, C = x.shape
    hd = C // n_head
    qkv = x @ w_attn + b_attn[0]                           # (B, T, 3C)
    q, k, v = jnp.split(qkv, 3, axis=-1)

    def split_heads(t):
        return t.reshape(B, T, n_head, hd).transpose(0, 2, 1, 3)   # (B, H, T, hd)

    qh, kh, vh = split_heads(q), split_heads(k), split_heads(v)
    w = jnp.einsum("bhqd,bhkd->bhqk", qh, kh) / math.sqrt(hd)
    mask = jnp.tril(jnp.ones((T, T), jnp.float32))[None, None]
    w = w * mask - 1e10 * (1.0 - mask)
    p = jax.nn.softmax(w, axis=-1)
    a = jnp.einsum("bhqk,bhkd->bhqd", p, vh)
    a = a.transpose(0, 2, 1, 3).reshape(B, T, C)
    a = a @ w_proj + b_proj[0]
    present = jnp.stack((kh, vh))                          # (2, B, H, T, hd)
    return a, present


if __name__ == "__main__":
    # Small config consistent with the module: n_embd=32, n_head=4, seq=8, batch=2.
    B, T, C, H = 2, 8, 32, 4

    key = jax.random.PRNGKey(0)
    kx, k1, k2, k3, k4 = jax.random.split(key, 5)

    x = jax.random.normal(kx, (B, T, C), dtype=jnp.float32)
    # Parameters stored as [in, out] (i.e. torch weight transposed).
    w_attn = jax.random.normal(k1, (C, 3 * C), dtype=jnp.float32) * 0.02
    b_attn = jax.random.normal(k2, (1, 3 * C), dtype=jnp.float32) * 0.02
    w_proj = jax.random.normal(k3, (C, C), dtype=jnp.float32) * 0.02
    b_proj = jax.random.normal(k4, (1, C), dtype=jnp.float32) * 0.02

    a, present = attention_forward(x, w_attn, b_attn, w_proj, b_proj, n_head=H)
    jax.block_until_ready((a, present))

    a_want, present_want = _reference(x, w_attn, b_attn, w_proj, b_proj, H)
    assert a.shape == (B, T, C)
    assert present.shape == (2, B, H, T, C // H)
    # bf16 MXU operands (f32 accumulation) -> looser tolerance than a pure-f32 kernel.
    assert jnp.allclose(a, a_want, atol=3e-2, rtol=3e-2), \
        float(jnp.max(jnp.abs(a - a_want)))
    assert jnp.allclose(present, present_want, atol=3e-2, rtol=3e-2), \
        float(jnp.max(jnp.abs(present - present_want)))

    print("KERNEL_OK")
</pallas_src>

<mosaic_0001>
module attributes {stable_mosaic.version = 11 : i64} {
  func.func @_qkv_head_split_kernel(%arg0: i32, %arg1: i32, %arg2: memref<1x8x32xf32, #tpu.memory_space<vmem>>, %arg3: memref<32x96xbf16, #tpu.memory_space<vmem>>, %arg4: memref<1x96xf32, #tpu.memory_space<vmem>>, %arg5: memref<1x4x8x8xbf16, #tpu.memory_space<vmem>>, %arg6: memref<2x1x4x8x8xf32, #tpu.memory_space<vmem>>) attributes {dimension_semantics = [#tpu.dimension_semantics<parallel>, #tpu.dimension_semantics<parallel>], iteration_bounds = array<i64: 2, 1>, scalar_prefetch = 0 : i64, scratch_operands = 0 : i64, tpu.core_type = #tpu.core_type<tc>, window_params = [{transform_indices = @transform_0, window_bounds = array<i64: 1, 8, 32>}, {pipeline_mode = #tpu.pipeline_mode<synchronous>, transform_indices = @transform_1, window_bounds = array<i64: 32, 96>}, {pipeline_mode = #tpu.pipeline_mode<synchronous>, transform_indices = @transform_2, window_bounds = array<i64: 1, 96>}, {transform_indices = @transform_3, window_bounds = array<i64: 1, 4, 8, 8>}, {transform_indices = @transform_4, window_bounds = array<i64: 2, 1, 4, 8, 8>}]} {
    %c0 = arith.constant 0 : index
    %c0_0 = arith.constant 0 : index
    %c0_1 = arith.constant 0 : index
    %0 = vector.load %arg2[%c0, %c0_0, %c0_1] : memref<1x8x32xf32, #tpu.memory_space<vmem>>, vector<1x8x32xf32>
    %1 = vector.shape_cast %0 : vector<1x8x32xf32> to vector<8x32xf32>
    %2 = arith.truncf %1 : vector<8x32xf32> to vector<8x32xbf16>
    %c0_2 = arith.constant 0 : index
    %c0_3 = arith.constant 0 : index
    %3 = vector.load %arg3[%c0_2, %c0_3] : memref<32x96xbf16, #tpu.memory_space<vmem>>, vector<32x96xbf16>
    %cst = arith.constant dense<0.000000e+00> : vector<8x96xf32>
    %4 = tpu.matmul %2, %3, %cst {dimension_numbers = #tpu.dot_dimension_numbers<[1], [0], [0], [1], [0, 0, 1, 1], [], []>} : vector<8x32xbf16>, vector<32x96xbf16>, vector<8x96xf32> -> vector<8x96xf32>
    %c0_4 = arith.constant 0 : index
    %c0_5 = arith.constant 0 : index
    %5 = vector.load %arg4[%c0_4, %c0_5] : memref<1x96xf32, #tpu.memory_space<vmem>>, vector<1x96xf32>
    %6 = vector.broadcast %5 : vector<1x96xf32> to vector<8x96xf32>
    %7 = arith.addf %4, %6 : vector<8x96xf32>
    %8 = vector.extract_strided_slice %7 {offsets = [0, 0], sizes = [8, 8], strides = [1, 1]} : vector<8x96xf32> to vector<8x8xf32>
    %cst_6 = arith.constant 0.353553385 : f32
    %9 = vector.broadcast %cst_6 : f32 to vector<8x8xf32>
    %10 = arith.mulf %8, %9 : vector<8x8xf32>
    %11 = arith.truncf %10 : vector<8x8xf32> to vector<8x8xbf16>
    %c0_7 = arith.constant 0 : index
    %c0_8 = arith.constant 0 : index
    %c0_9 = arith.constant 0 : index
    %c0_10 = arith.constant 0 : index
    %12 = vector.load %arg5[%c0_7, %c0_8, %c0_9, %c0_10] : memref<1x4x8x8xbf16, #tpu.memory_space<vmem>>, vector<1x1x8x8xbf16>
    %13 = vector.shape_cast %12 : vector<1x1x8x8xbf16> to vector<8x8xbf16>
    %14 = vector.shape_cast %11 : vector<8x8xbf16> to vector<1x1x8x8xbf16>
    tpu.vector_store %arg5[%c0_7, %c0_8, %c0_9, %c0_10], %14 {strides = array<i32>} : memref<1x4x8x8xbf16, #tpu.memory_space<vmem>>, vector<1x1x8x8xbf16>,
    %15 = vector.extract_strided_slice %7 {offsets = [0, 32], sizes = [8, 8], strides = [1, 1]} : vector<8x96xf32> to vector<8x8xf32>
    %c0_11 = arith.constant 0 : index
    %c0_12 = arith.constant 0 : index
    %c0_13 = arith.constant 0 : index
    %c0_14 = arith.constant 0 : index
    %c0_15 = arith.constant 0 : index
    %16 = vector.load %arg6[%c0_11, %c0_12, %c0_13, %c0_14, %c0_15] : memref<2x1x4x8x8xf32, #tpu.memory_space<vmem>>, vector<1x1x1x8x8xf32>
    %17 = vector.shape_cast %16 : vector<1x1x1x8x8xf32> to vector<8x8xf32>
    %18 = vector.shape_cast %15 : vector<8x8xf32> to vector<1x1x1x8x8xf32>
    tpu.vector_store %arg6[%c0_11, %c0_12, %c0_13, %c0_14, %c0_15], %18 {strides = array<i32>} : memref<2x1x4x8x8xf32, #tpu.memory_space<vmem>>, vector<1x1x1x8x8xf32>,
    %19 = vector.extract_strided_slice %7 {offsets = [0, 64], sizes = [8, 8], strides = [1, 1]} : vector<8x96xf32> to vector<8x8xf32>
    %c1 = arith.constant 1 : index
    %c0_16 = arith.constant 0 : index
    %c0_17 = arith.constant 0 : index
    %c0_18 = arith.constant 0 : index
    %c0_19 = arith.constant 0 : index
    %20 = vector.load %arg6[%c1, %c0_16, %c0_17, %c0_18, %c0_19] : memref<2x1x4x8x8xf32, #tpu.memory_space<vmem>>, vector<1x1x1x8x8xf32>
    %21 = vector.shape_cast %20 : vector<1x1x1x8x8xf32> to vector<8x8xf32>
    %22 = vector.shape_cast %19 : vector<8x8xf32> to vector<1x1x1x8x8xf32>
    tpu.vector_store %arg6[%c1, %c0_16, %c0_17, %c0_18, %c0_19], %22 {strides = array<i32>} : memref<2x1x4x8x8xf32, #tpu.memory_space<vmem>>, vector<1x1x1x8x8xf32>,
    %23 = vector.extract_strided_slice %7 {offsets = [0, 8], sizes = [8, 8], strides = [1, 1]} : vector<8x96xf32> to vector<8x8xf32>
    %cst_20 = arith.constant 0.353553385 : f32
    %24 = vector.broadcast %cst_20 : f32 to vector<8x8xf32>
    %25 = arith.mulf %23, %24 : vector<8x8xf32>
    %26 = arith.truncf %25 : vector<8x8xf32> to vector<8x8xbf16>
    %c0_21 = arith.constant 0 : index
    %c1_22 = arith.constant 1 : index
    %c0_23 = arith.constant 0 : index
    %c0_24 = arith.constant 0 : index
    %27 = vector.load %arg5[%c0_21, %c1_22, %c0_23, %c0_24] : memref<1x4x8x8xbf16, #tpu.memory_space<vmem>>, vector<1x1x8x8xbf16>
    %28 = vector.shape_cast %27 : vector<1x1x8x8xbf16> to vector<8x8xbf16>
    %29 = vector.shape_cast %26 : vector<8x8xbf16> to vector<1x1x8x8xbf16>
    tpu.vector_store %arg5[%c0_21, %c1_22, %c0_23, %c0_24], %29 {strides = array<i32>} : memref<1x4x8x8xbf16, #tpu.memory_space<vmem>>, vector<1x1x8x8xbf16>,
    %30 = vector.extract_strided_slice %7 {offsets = [0, 40], sizes = [8, 8], strides = [1, 1]} : vector<8x96xf32> to vector<8x8xf32>
    %c0_25 = arith.constant 0 : index
    %c0_26 = arith.constant 0 : index
    %c1_27 = arith.constant 1 : index
    %c0_28 = arith.constant 0 : index
    %c0_29 = arith.constant 0 : index
    %31 = vector.load %arg6[%c0_25, %c0_26, %c1_27, %c0_28, %c0_29] : memref<2x1x4x8x8xf32, #tpu.memory_space<vmem>>, vector<1x1x1x8x8xf32>
    %32 = vector.shape_cast %31 : vector<1x1x1x8x8xf32> to vector<8x8xf32>
    %33 = vector.shape_cast %30 : vector<8x8xf32> to vector<1x1x1x8x8xf32>
    tpu.vector_store %arg6[%c0_25, %c0_26, %c1_27, %c0_28, %c0_29], %33 {strides = array<i32>} : memref<2x1x4x8x8xf32, #tpu.memory_space<vmem>>, vector<1x1x1x8x8xf32>,
    %34 = vector.extract_strided_slice %7 {offsets = [0, 72], sizes = [8, 8], strides = [1, 1]} : vector<8x96xf32> to vector<8x8xf32>
    %c1_30 = arith.constant 1 : index
    %c0_31 = arith.constant 0 : index
    %c1_32 = arith.constant 1 : index
    %c0_33 = arith.constant 0 : index
    %c0_34 = arith.constant 0 : index
    %35 = vector.load %arg6[%c1_30, %c0_31, %c1_32, %c0_33, %c0_34] : memref<2x1x4x8x8xf32, #tpu.memory_space<vmem>>, vector<1x1x1x8x8xf32>
    %36 = vector.shape_cast %35 : vector<1x1x1x8x8xf32> to vector<8x8xf32>
    %37 = vector.shape_cast %34 : vector<8x8xf32> to vector<1x1x1x8x8xf32>
    tpu.vector_store %arg6[%c1_30, %c0_31, %c1_32, %c0_33, %c0_34], %37 {strides = array<i32>} : memref<2x1x4x8x8xf32, #tpu.memory_space<vmem>>, vector<1x1x1x8x8xf32>,
    %38 = vector.extract_strided_slice %7 {offsets = [0, 16], sizes = [8, 8], strides = [1, 1]} : vector<8x96xf32> to vector<8x8xf32>
    %cst_35 = arith.constant 0.353553385 : f32
    %39 = vector.broadcast %cst_35 : f32 to vector<8x8xf32>
    %40 = arith.mulf %38, %39 : vector<8x8xf32>
    %41 = arith.truncf %40 : vector<8x8xf32> to vector<8x8xbf16>
    %c0_36 = arith.constant 0 : index
    %c2 = arith.constant 2 : index
    %c0_37 = arith.constant 0 : index
    %c0_38 = arith.constant 0 : index
    %42 = vector.load %arg5[%c0_36, %c2, %c0_37, %c0_38] : memref<1x4x8x8xbf16, #tpu.memory_space<vmem>>, vector<1x1x8x8xbf16>
    %43 = vector.shape_cast %42 : vector<1x1x8x8xbf16> to vector<8x8xbf16>
    %44 = vector.shape_cast %41 : vector<8x8xbf16> to vector<1x1x8x8xbf16>
    tpu.vector_store %arg5[%c0_36, %c2, %c0_37, %c0_38], %44 {strides = array<i32>} : memref<1x4x8x8xbf16, #tpu.memory_space<vmem>>, vector<1x1x8x8xbf16>,
    %45 = vector.extract_strided_slice %7 {offsets = [0, 48], sizes = [8, 8], strides = [1, 1]} : vector<8x96xf32> to vector<8x8xf32>
    %c0_39 = arith.constant 0 : index
    %c0_40 = arith.constant 0 : index
    %c2_41 = arith.constant 2 : index
    %c0_42 = arith.constant 0 : index
    %c0_43 = arith.constant 0 : index
    %46 = vector.load %arg6[%c0_39, %c0_40, %c2_41, %c0_42, %c0_43] : memref<2x1x4x8x8xf32, #tpu.memory_space<vmem>>, vector<1x1x1x8x8xf32>
    %47 = vector.shape_cast %46 : vector<1x1x1x8x8xf32> to vector<8x8xf32>
    %48 = vector.shape_cast %45 : vector<8x8xf32> to vector<1x1x1x8x8xf32>
    tpu.vector_store %arg6[%c0_39, %c0_40, %c2_41, %c0_42, %c0_43], %48 {strides = array<i32>} : memref<2x1x4x8x8xf32, #tpu.memory_space<vmem>>, vector<1x1x1x8x8xf32>,
    %49 = vector.extract_strided_slice %7 {offsets = [0, 80], sizes = [8, 8], strides = [1, 1]} : vector<8x96xf32> to vector<8x8xf32>
    %c1_44 = arith.constant 1 : index
    %c0_45 = arith.constant 0 : index
    %c2_46 = arith.constant 2 : index
    %c0_47 = arith.constant 0 : index
    %c0_48 = arith.constant 0 : index
    %50 = vector.load %arg6[%c1_44, %c0_45, %c2_46, %c0_47, %c0_48] : memref<2x1x4x8x8xf32, #tpu.memory_space<vmem>>, vector<1x1x1x8x8xf32>
    %51 = vector.shape_cast %50 : vector<1x1x1x8x8xf32> to vector<8x8xf32>
    %52 = vector.shape_cast %49 : vector<8x8xf32> to vector<1x1x1x8x8xf32>
    tpu.vector_store %arg6[%c1_44, %c0_45, %c2_46, %c0_47, %c0_48], %52 {strides = array<i32>} : memref<2x1x4x8x8xf32, #tpu.memory_space<vmem>>, vector<1x1x1x8x8xf32>,
    %53 = vector.extract_strided_slice %7 {offsets = [0, 24], sizes = [8, 8], strides = [1, 1]} : vector<8x96xf32> to vector<8x8xf32>
    %cst_49 = arith.constant 0.353553385 : f32
    %54 = vector.broadcast %cst_49 : f32 to vector<8x8xf32>
    %55 = arith.mulf %53, %54 : vector<8x8xf32>
    %56 = arith.truncf %55 : vector<8x8xf32> to vector<8x8xbf16>
    %c0_50 = arith.constant 0 : index
    %c3 = arith.constant 3 : index
    %c0_51 = arith.constant 0 : index
    %c0_52 = arith.constant 0 : index
    %57 = vector.load %arg5[%c0_50, %c3, %c0_51, %c0_52] : memref<1x4x8x8xbf16, #tpu.memory_space<vmem>>, vector<1x1x8x8xbf16>
    %58 = vector.shape_cast %57 : vector<1x1x8x8xbf16> to vector<8x8xbf16>
    %59 = vector.shape_cast %56 : vector<8x8xbf16> to vector<1x1x8x8xbf16>
    tpu.vector_store %arg5[%c0_50, %c3, %c0_51, %c0_52], %59 {strides = array<i32>} : memref<1x4x8x8xbf16, #tpu.memory_space<vmem>>, vector<1x1x8x8xbf16>,
    %60 = vector.extract_strided_slice %7 {offsets = [0, 56], sizes = [8, 8], strides = [1, 1]} : vector<8x96xf32> to vector<8x8xf32>
    %c0_53 = arith.constant 0 : index
    %c0_54 = arith.constant 0 : index
    %c3_55 = arith.constant 3 : index
    %c0_56 = arith.constant 0 : index
    %c0_57 = arith.constant 0 : index
    %61 = vector.load %arg6[%c0_53, %c0_54, %c3_55, %c0_56, %c0_57] : memref<2x1x4x8x8xf32, #tpu.memory_space<vmem>>, vector<1x1x1x8x8xf32>
    %62 = vector.shape_cast %61 : vector<1x1x1x8x8xf32> to vector<8x8xf32>
    %63 = vector.shape_cast %60 : vector<8x8xf32> to vector<1x1x1x8x8xf32>
    tpu.vector_store %arg6[%c0_53, %c0_54, %c3_55, %c0_56, %c0_57], %63 {strides = array<i32>} : memref<2x1x4x8x8xf32, #tpu.memory_space<vmem>>, vector<1x1x1x8x8xf32>,
    %64 = vector.extract_strided_slice %7 {offsets = [0, 88], sizes = [8, 8], strides = [1, 1]} : vector<8x96xf32> to vector<8x8xf32>
    %c1_58 = arith.constant 1 : index
    %c0_59 = arith.constant 0 : index
    %c3_60 = arith.constant 3 : index
    %c0_61 = arith.constant 0 : index
    %c0_62 = arith.constant 0 : index
    %65 = vector.load %arg6[%c1_58, %c0_59, %c3_60, %c0_61, %c0_62] : memref<2x1x4x8x8xf32, #tpu.memory_space<vmem>>, vector<1x1x1x8x8xf32>
    %66 = vector.shape_cast %65 : vector<1x1x1x8x8xf32> to vector<8x8xf32>
    %67 = vector.shape_cast %64 : vector<8x8xf32> to vector<1x1x1x8x8xf32>
    tpu.vector_store %arg6[%c1_58, %c0_59, %c3_60, %c0_61, %c0_62], %67 {strides = array<i32>} : memref<2x1x4x8x8xf32, #tpu.memory_space<vmem>>, vector<1x1x1x8x8xf32>,
    return
  }
  func.func @transform_0(%arg0: i32, %arg1: i32) -> (i32, i32, i32) {
    %c0_i32 = arith.constant 0 : i32
    %c0_i32_0 = arith.constant 0 : i32
    return %arg0, %arg1, %c0_i32 : i32, i32, i32
  }
  func.func @transform_1(%arg0: i32, %arg1: i32) -> (i32, i32) {
    %c0_i32 = arith.constant 0 : i32
    %c0_i32_0 = arith.constant 0 : i32
    %c0_i32_1 = arith.constant 0 : i32
    return %c0_i32, %c0_i32_0 : i32, i32
  }
  func.func @transform_2(%arg0: i32, %arg1: i32) -> (i32, i32) {
    %c0_i32 = arith.constant 0 : i32
    %c0_i32_0 = arith.constant 0 : i32
    %c0_i32_1 = arith.constant 0 : i32
    return %c0_i32, %c0_i32_0 : i32, i32
  }
  func.func @transform_3(%arg0: i32, %arg1: i32) -> (i32, i32, i32, i32) {
    %c0_i32 = arith.constant 0 : i32
    %c0_i32_0 = arith.constant 0 : i32
    %c0_i32_1 = arith.constant 0 : i32
    return %arg0, %c0_i32, %arg1, %c0_i32_0 : i32, i32, i32, i32
  }
  func.func @transform_4(%arg0: i32, %arg1: i32) -> (i32, i32, i32, i32, i32) {
    %c0_i32 = arith.constant 0 : i32
    %c0_i32_0 = arith.constant 0 : i32
    %c0_i32_1 = arith.constant 0 : i32
    %c0_i32_2 = arith.constant 0 : i32
    return %c0_i32, %arg0, %c0_i32_0, %arg1, %c0_i32_1 : i32, i32, i32, i32, i32
  }
}

</mosaic_0001>

<llo_original>
// kernel: tpu_custom_call.1
$region0: #{tpu_custom_call.1}
  #allocation0 [shape = 'u32[]', space=smem, size = 0x4, offset = 0x4, fixed_abs, tag = 'smem constant byte address 0x4 - core index']
  #allocation1 [shape = 'u32[144,128]{1,0:T(1,128)}', space=vmem, size = 0x12000, scoped, tag = 'internal scratch']
  #allocation10 [shape = 's32[]', space=sflag, size = 0x4, offset = 0, fixed_abs, tag = 'sflag constant byte address 0x0 - dummy sync flag']
  %s0 = inlined_call_operand.hbm [shape: f32[2,8,32], index: 0, kind: input, shape index: {}]
  %s1 = inlined_call_operand.hbm [shape: bf16[32,96], index: 1, kind: input, shape index: {}]
  %s2 = inlined_call_operand.vmem [shape: f32[1,96], index: 2, kind: input, shape index: {}]
  %s3 = inlined_call_operand.hbm [shape: bf16[2,4,8,8], index: 3, kind: output, shape index: {0}]
  %s4 = inlined_call_operand.hbm [shape: f32[2,2,4,8,8], index: 4, kind: output, shape index: {1}]
  %5 = xla_tuple %s3, %s4
  %s6 = sld [smem:[#allocation0]]
  $region61: #{tpu_custom_call.1} parent=0
    _
  %s8 = ssub.s32 1, %s6
  %s9 = scalar_select 0, %s8, %s6
  $region1: #{tpu_custom_call.1} parent=0
    #allocation2 [shape = 'u8[8192]{0}', space=vmem, size = 0x2000, scoped, tag = 'input window, operand 0']
    #allocation3 [shape = 's32[2]{0}', space=sflag, size = 0x8, scoped, tag = 'scoped memory for tpu_custom_call.1']
    #allocation4 [shape = 's32[2]{0}', space=sflag, size = 0x8, scoped, tag = 'scoped memory for tpu_custom_call.1']
    #allocation5 [shape = 'u8[8192]{0}', space=vmem, size = 0x2000, scoped, tag = 'input window, operand 1, single buffered']
    #allocation6 [shape = 's32[1]{0}', space=sflag, size = 0x4, scoped, tag = 'scoped memory for tpu_custom_call.1']
    #allocation7 [shape = 'u8[16384]{0}', space=vmem, size = 0x4000, scoped, tag = 'output window, operand 0']
    #allocation8 [shape = 'u8[65536]{0}', space=vmem, size = 0x10000, scoped, tag = 'output window, operand 1']
    #allocation9 [shape = 's32[2]{0}', space=sflag, size = 0x8, scoped, tag = 'scoped memory for tpu_custom_call.1']
    %10 = vsyncpa [#allocation3], 0
    %s11 = scalar_lea.sflag [#allocation3], 1
    %12 = vsyncpa %s11, 0
    %13 = vsyncpa [#allocation6], 0
    %14 = vsyncpa [#allocation4], 0
    %s15 = scalar_lea.sflag [#allocation4], 1
    %16 = vsyncpa %s15, 0
    %17 = vsyncpa [#allocation9], 0
    %s18 = scalar_lea.sflag [#allocation9], 1
    %19 = vsyncpa %s18, 0
    loop: start=0, step=1, limit=4
    $region2: #{tpu_custom_call.1} parent=1 // loop_pre_header
      _
    $region3: #{tpu_custom_call.1} parent=1 // loop_header
      %s21 = sphi 0, %s25
      %p22 = scmp.ge.s32.totalorder %s21, 4
      %s28 = sphi 0, %s40
      %s29 = sphi 0, %s36
      %s30 = sphi 0, %s28
      %s31 = sphi 0, %s29
      %s32 = sphi 0, %s30
      %s33 = sphi 0, %s31
      %s45 = sphi 0, %s47
      %s48 = sphi 0, %s45
      %s49 = sphi 0, %s48
      %s65 = sphi 0, %s49
      %s69 = sphi 0, %s69
      %s71 = sphi 0, %s69
      %s72 = sphi 0, %s71
      %s86 = sphi 0, %s72
      %s90 = sphi 0, %s90
      %s92 = sphi 0, %s90
      %s93 = sphi 0, %s92
      %s107 = sphi 0, %s93
      %s115 = sphi 0, %s117
      %s118 = sphi 0, %s115
      %s119 = sphi 0, %s118
      %s135 = sphi 0, %s119
      %s143 = sphi 0, %s145
      %s146 = sphi 0, %s143
      %s147 = sphi 0, %s146
      %s163 = sphi 0, %s147
    $region4: #{tpu_custom_call.1} parent=1 // loop_header_branch
      %24 = sbr.rel (%p22) target = $region8
    $region5: #{tpu_custom_call.1} parent=1 // loop_body
      %s26 = ssub.s32 %s21, 1
      %s27 = ssub.s32 %s21, 2
      %s34 = sadd.s32 1, %s29
      %p35 = scmp.ge.s32.totalorder %s34, 1
      %s36 = scalar_select %p35, 0, %s34
      %s37 = sadd.s32 1, %s28
      %s38 = scalar_select %p35, %s37, %s28
      %p39 = scmp.ge.s32.totalorder %s38, 2
      %s40 = scalar_select %p39, 0, %s38
      %s41 = ssub.s32 %s28, %s40
      %s42 = ssub.s32 %s29, %s36
      %s43 = sor.u32 %s41, %s42
      %p44 = scmp.eq.s32.totalorder %s43, 0
      %s46 = sadd.s32 %s45, 1
      %s47 = scalar_select %p44, %s45, %s46
      %p50 = pneg %p44
      %p51 = scmp.eq.s32.totalorder %s21, 1
      %p52 = por %p50, %p51
      %p53 = scmp.ne.s32.totalorder %s45, %s48
      %p54 = scmp.eq.s32.totalorder %s21, 0
      %p55 = por %p53, %p54
      %p56 = scmp.ne.s32.totalorder %s45, %s48
      %p57 = scmp.eq.s32.totalorder %s26, 1
      %p58 = por %p56, %p57
      %p59 = scmp.ne.s32.totalorder %s48, %s49
      %p60 = scmp.eq.s32.totalorder %s26, 0
      %p61 = por %p59, %p60
      %p62 = scmp.ne.s32.totalorder %s48, %s49
      %p63 = scmp.eq.s32.totalorder %s27, 1
      %p64 = por %p62, %p63
      %p66 = scmp.ne.s32.totalorder %s49, %s65
      %p67 = scmp.eq.s32.totalorder %s27, 0
      %p68 = por %p66, %p67
      %s70 = sadd.s32 %s69, 1
      %p73 = scmp.eq.s32.totalorder %s21, 1
      %p74 = scmp.ne.s32.totalorder %s69, %s71
      %p75 = scmp.eq.s32.totalorder %s21, 0
      %p76 = por %p74, %p75
      %p77 = scmp.ne.s32.totalorder %s69, %s71
      %p78 = scmp.eq.s32.totalorder %s26, 1
      %p79 = por %p77, %p78
      %p80 = scmp.ne.s32.totalorder %s71, %s72
      %p81 = scmp.eq.s32.totalorder %s26, 0
      %p82 = por %p80, %p81
      %p83 = scmp.ne.s32.totalorder %s71, %s72
      %p84 = scmp.eq.s32.totalorder %s27, 1
      %p85 = por %p83, %p84
      %p87 = scmp.ne.s32.totalorder %s72, %s86
      %p88 = scmp.eq.s32.totalorder %s27, 0
      %p89 = por %p87, %p88
      %s91 = sadd.s32 %s90, 1
      %p94 = scmp.eq.s32.totalorder %s21, 1
      %p95 = scmp.ne.s32.totalorder %s90, %s92
      %p96 = scmp.eq.s32.totalorder %s21, 0
      %p97 = por %p95, %p96
      %p98 = scmp.ne.s32.totalorder %s90, %s92
      %p99 = scmp.eq.s32.totalorder %s26, 1
      %p100 = por %p98, %p99
      %p101 = scmp.ne.s32.totalorder %s92, %s93
      %p102 = scmp.eq.s32.totalorder %s26, 0
      %p103 = por %p101, %p102
      %p104 = scmp.ne.s32.totalorder %s92, %s93
      %p105 = scmp.eq.s32.totalorder %s27, 1
      %p106 = por %p104, %p105
      %p108 = scmp.ne.s32.totalorder %s93, %s107
      %p109 = scmp.eq.s32.totalorder %s27, 0
      %p110 = por %p108, %p109
      %s111 = ssub.s32 %s28, %s40
      %s112 = ssub.s32 %s29, %s36
      %s113 = sor.u32 %s111, %s112
      %p114 = scmp.eq.s32.totalorder %s113, 0
      %s116 = sadd.s32 %s115, 1
      %s117 = scalar_select %p114, %s115, %s116
      %p120 = pneg %p114
      %p121 = scmp.eq.s32.totalorder %s21, 1
      %p122 = por %p120, %p121
      %p123 = scmp.ne.s32.totalorder %s115, %s118
      %p124 = scmp.eq.s32.totalorder %s21, 0
      %p125 = por %p123, %p124
      %p126 = scmp.ne.s32.totalorder %s115, %s118
      %p127 = scmp.eq.s32.totalorder %s26, 1
      %p128 = por %p126, %p127
      %p129 = scmp.ne.s32.totalorder %s118, %s119
      %p130 = scmp.eq.s32.totalorder %s26, 0
      %p131 = por %p129, %p130
      %p132 = scmp.ne.s32.totalorder %s118, %s119
      %p133 = scmp.eq.s32.totalorder %s27, 1
      %p134 = por %p132, %p133
      %p136 = scmp.ne.s32.totalorder %s119, %s135
      %p137 = scmp.eq.s32.totalorder %s27, 0
      %p138 = por %p136, %p137
      %s139 = ssub.s32 %s28, %s40
      %s140 = ssub.s32 %s29, %s36
      %s141 = sor.u32 %s139, %s140
      %p142 = scmp.eq.s32.totalorder %s141, 0
      %s144 = sadd.s32 %s143, 1
      %s145 = scalar_select %p142, %s143, %s144
      %p148 = pneg %p142
      %p149 = scmp.eq.s32.totalorder %s21, 1
      %p150 = por %p148, %p149
      %p151 = scmp.ne.s32.totalorder %s143, %s146
      %p152 = scmp.eq.s32.totalorder %s21, 0
      %p153 = por %p151, %p152
      %p154 = scmp.ne.s32.totalorder %s143, %s146
      %p155 = scmp.eq.s32.totalorder %s26, 1
      %p156 = por %p154, %p155
      %p157 = scmp.ne.s32.totalorder %s146, %s147
      %p158 = scmp.eq.s32.totalorder %s26, 0
      %p159 = por %p157, %p158
      %p160 = scmp.ne.s32.totalorder %s146, %s147
      %p161 = scmp.eq.s32.totalorder %s27, 1
      %p162 = por %p160, %p161
      %p164 = scmp.ne.s32.totalorder %s147, %s163
      %p165 = scmp.eq.s32.totalorder %s27, 0
      %p166 = por %p164, %p165
      %p167 = scmp.le.s32.totalorder 1, %s21
      %p168 = scmp.lt.s32.totalorder %s21, 3
      %p169 = pnand %p167, %p168
      %p170 = pneg %p169
      // Predicated region
      $region9: #{tpu_custom_call.1} parent=5 // pred_check
        _
      $region10: #{tpu_custom_call.1} parent=5 // pred_check_branch
        %172 = sbr.rel (%p169) target = $region12
      $region11: #{tpu_custom_call.1} parent=5 // pred_region
        %s173 = ssub.s32 %s21, 1
        // Predicated region
        $region13: #{tpu_custom_call.1} parent=11 // pred_check
          %p174 = pneg %p82
        $region14: #{tpu_custom_call.1} parent=11 // pred_check_branch
          %176 = sbr.rel (%p174) target = $region16
        $region15: #{tpu_custom_call.1} parent=11 // pred_region
          %s178 = ssub.s32 256, 256
          %179 = vsyncadd [#allocation6], %s178
          %s180 = sshll.u32 [#allocation5], 4
          %s181 = int_to_ptr.vmem [resolvable:$true] %s180
          %186 = dma.hbm_to_vmem [thread:$0]  %s1, 256, %s181, [#allocation6], 64, 64, 4
        $region16: #{tpu_custom_call.1} parent=11 // pred_fallthru
          _
        // Predicated region
        $region17: #{tpu_custom_call.1} parent=11 // pred_check
          %p187 = pneg %p103
        $region18: #{tpu_custom_call.1} parent=11 // pred_check_branch
          %189 = sbr.rel (%p187) target = $region20
        $region19: #{tpu_custom_call.1} parent=11 // pred_region
          _
        $region20: #{tpu_custom_call.1} parent=11 // pred_fallthru
          _
      $region12: #{tpu_custom_call.1} parent=5 // pred_fallthru
        _
      %p190 = scmp.lt.s32.totalorder %s21, 2
      // Predicated region
      $region21: #{tpu_custom_call.1} parent=5 // pred_check
        %p191 = pneg %p190
      $region22: #{tpu_custom_call.1} parent=5 // pred_check_branch
        %193 = sbr.rel (%p191) target = $region24
      $region23: #{tpu_custom_call.1} parent=5 // pred_region
        // Predicated region
        $region25: #{tpu_custom_call.1} parent=23 // pred_check
          %p194 = pneg %p55
        $region26: #{tpu_custom_call.1} parent=23 // pred_check_branch
          %196 = sbr.rel (%p194) target = $region28
        $region27: #{tpu_custom_call.1} parent=23 // pred_region
          %s197 = sand.u32 %s45, 1
          %s198 = scalar_lea.sflag [#allocation3], %s197
          %s199 = sand.u32 %s45, 1
          %s200 = smul.addr %s199, 8
          %s201 = scalar_lea.vmem [#allocation2], %s200
          %s203 = ssub.s32 128, 128
          %204 = vsyncadd %s198, %s203
          %s205 = sadd.s32 %s29, %s28
          %s206 = smul.addr %s205, 128
          %s207 = scalar_lea.hbm %s0, %s206
          %s209 = sshll.u32 %s201, 4
          %s210 = int_to_ptr.vmem [resolvable:$true] %s209
          %212 = dma.hbm_to_vmem [thread:$0]  %s207, 128, %s210, %s198
        $region28: #{tpu_custom_call.1} parent=23 // pred_fallthru
          _
      $region24: #{tpu_custom_call.1} parent=5 // pred_fallthru
        _
      %p213 = scmp.le.s32.totalorder 1, %s21
      %p214 = scmp.lt.s32.totalorder %s21, 3
      %p215 = pnand %p213, %p214
      %p216 = pneg %p215
      // Predicated region
      $region29: #{tpu_custom_call.1} parent=5 // pred_check
        _
      $region30: #{tpu_custom_call.1} parent=5 // pred_check_branch
        %218 = sbr.rel (%p215) target = $region32
      $region31: #{tpu_custom_call.1} parent=5 // pred_region
        %s219 = ssub.s32 %s21, 1
        %s220 = sand.u32 %s48, 1
        %s221 = scalar_lea.sflag [#allocation3], %s220
        %s222 = sand.u32 %s48, 1
        %s223 = smul.addr %s222, 8
        %s224 = scalar_lea.vmem [#allocation2], %s223
        // Predicated region
        $region33: #{tpu_custom_call.1} parent=31 // pred_check
          %p225 = pneg %p61
        $region34: #{tpu_custom_call.1} parent=31 // pred_check_branch
          %227 = sbr.rel (%p225) target = $region36
        $region35: #{tpu_custom_call.1} parent=31 // pred_region
          %228 = dma.done %s221, 128
        $region36: #{tpu_custom_call.1} parent=31 // pred_fallthru
          _
        // Predicated region
        $region37: #{tpu_custom_call.1} parent=31 // pred_check
          %p229 = pneg %p82
        $region38: #{tpu_custom_call.1} parent=31 // pred_check_branch
          %231 = sbr.rel (%p229) target = $region40
        $region39: #{tpu_custom_call.1} parent=31 // pred_region
          %232 = dma.done [#allocation6], 256
        $region40: #{tpu_custom_call.1} parent=31 // pred_fallthru
          _
        %s233 = sand.u32 %s48, 1
        %s234 = scalar_lea.sflag [#allocation3], %s233
        %s235 = sand.u32 %s48, 1
        %s236 = smul.addr %s235, 8
        %s237 = scalar_lea.vmem [#allocation2], %s236
        %p238 = pneg %p61
        %p239 = pneg %p58
        %p240 = pneg %p82
        %p241 = pneg %p79
        %p242 = pneg %p103
        %p243 = pneg %p100
        %p244 = pneg %p131
        %p245 = pneg %p128
        %s246 = sand.u32 %s118, 1
        %s247 = scalar_lea.sflag [#allocation4], %s246
        %s248 = sand.u32 %s118, 1
        %s249 = smul.addr %s248, 16
        %s250 = scalar_lea.vmem [#allocation7], %s249
        %p251 = pneg %p159
        %p252 = pneg %p156
        %s253 = sand.u32 %s146, 1
        %s254 = scalar_lea.sflag [#allocation9], %s253
        %s255 = sand.u32 %s146, 1
        %s256 = smul.addr %s255, 64
        %s257 = scalar_lea.vmem [#allocation8], %s256
        %v259 = vld [vmem:[%s224] sm:$0xff]
        %v260 = vpack.c.bf16 %v259, %v259
        %v261 = vld [vmem:[#allocation5] sm:$0xf]
        %v262 = vld [vmem:[#allocation5 + $0x4] sm:$0xf]
        %v263 = vld [vmem:[#allocation5 + $0x8] sm:$0xf]
        %v264 = vld [vmem:[#allocation5 + $0xc] sm:$0xf]
        %v265 = vld [vmem:[%s2] sm:$0x1]
        %v267 = vlaneseq
        %v268 = vshrl.u32 %v267, 7
        %v269 = vsub.s32 0, %v268
        %v270 = vrot.slane %v265, %v269
        %v276 = vunpack.c.l.b16 %v261
        %v277 = vunpack.c.l.b16 %v262
        %v278 = vunpack.c.l.b16 %v263
        %v279 = vunpack.c.l.b16 %v264
        %v280 = vpack.c.b16 %v277, %v276
        %v281 = vpack.c.b16 %v279, %v278
        %vm284 = vcmask 261120
        %v286 = vsel %vm284, %v260, 0
        %288 = vmatprep.subr.bf16.mxu0 0
        %289 = vmatpush1.bf16.msra.mxu0 0
        %290 = vmatprep.subr.bf16.mxu0 0
        %291 = vmatpush1.bf16.msra.mxu0 0
        %292 = vmatprep.subr.bf16.mxu0 0
        %293 = vmatpush1.bf16.msra.mxu0 0
        %294 = vmatprep.subr.bf16.mxu0 0
        %295 = vmatpush1.bf16.msra.mxu0 0
        %296 = vmatprep.subr.bf16.mxu0 0
        %297 = vmatpush1.bf16.msra.mxu0 0
        %298 = vmatprep.subr.bf16.mxu0 0
        %299 = vmatpush1.bf16.msra.mxu0 0
        %300 = vmatprep.subr.bf16.mxu0 0
        %301 = vmatpush1.bf16.msra.mxu0 %v281
        %302 = vmatprep.subr.bf16.mxu0 0
        %303 = vmatpush1.bf16.msra.mxu0 %v280
        %304 = vmatprep.subr.bf16.mxu0 0
        %305 = vmatpush2.bf16.msra.mxu0 0
        %306 = vmatprep.subr.bf16.mxu0 0
        %307 = vmatpush2.bf16.msra.mxu0 0
        %308 = vmatprep.subr.bf16.mxu0 0
        %309 = vmatpush2.bf16.msra.mxu0 0
        %310 = vmatprep.subr.bf16.mxu0 0
        %311 = vmatpush2.bf16.msra.mxu0 0
        %312 = vmatprep.subr.bf16.mxu0 0
        %313 = vmatpush2.bf16.msra.mxu0 0
        %314 = vmatprep.subr.bf16.mxu0 0
        %315 = vmatpush2.bf16.msra.mxu0 0
        %316 = vmatprep.subr.bf16.mxu0 0
        %317 = vmatpush2.bf16.msra.mxu0 0
        %318 = vmatprep.subr.bf16.mxu0 0
        %319 = vmatpush2.bf16.msra.mxu0 0
        %320 = vmatprep.mubr.bf16.mxu0 0
        %321 = vmatmul.mubr.bf16.gmra.mxu0 %v286
        %v322 = vpop.f32.mrf.mxu0
        %v323 = vadd.f32 %v270, %v322
        %v324 = vpop.f32.mrf.mxu0
        %v325 = vpop.f32.mrf.mxu0
        %v326 = vpop.f32.mrf.mxu0
        %327 = vdwg.mxu0
        %v328 = vmul.f32 %v323, 0.35355338
        %v329 = vpack.c.bf16 %v328, %v328
        %vm330 = vcmask 60416
        %331 = vst.msk [vmem:[%s250] sm:$0xf] %vm330, %v329
        %333 = vrot.lane.b32.xlu0 %v323, 96
        %v334 = vpop.permute.xlu0 %333
        %vm336 = vcmask 64512
        %337 = vst.msk [vmem:[%s257] sm:$0xff] %vm336, %v334
        %338 = vrot.lane.b32.xlu0 %v323, 64
        %v339 = vpop.permute.xlu0 %338
        %s341 = scalar_lea.vmem %s257, 32 [#allocation8]
        %342 = vst.msk [vmem:[%s341] sm:$0xff] %vm336, %v339
        %v344 = vunpack.c.l.b16 %v329
        %v345 = vpack.c.b16 %v344, %v344
        %346 = vrot.lane.b32.xlu0 %v345, 120
        %v347 = vpop.permute.xlu0 %346
        %s349 = scalar_lea.vmem %s250, 4 [#allocation7]
        %350 = vst.msk [vmem:[%s349] sm:$0xf] %vm330, %v347
        %351 = vrot.lane.b32.xlu0 %v323, 88
        %v352 = vpop.permute.xlu0 %351
        %s354 = scalar_lea.vmem %s257, 8 [#allocation8]
        %355 = vst.msk [vmem:[%s354] sm:$0xff] %vm336, %v352
        %356 = vrot.lane.b32.xlu0 %v323, 56
        %v357 = vpop.permute.xlu0 %356
        %s359 = scalar_lea.vmem %s257, 40 [#allocation8]
        %360 = vst.msk [vmem:[%s359] sm:$0xff] %vm336, %v357
        %361 = vrot.lane.b32.xlu0 %v345, 112
        %v362 = vpop.permute.xlu0 %361
        %s364 = scalar_lea.vmem %s250, 8 [#allocation7]
        %365 = vst.msk [vmem:[%s364] sm:$0xf] %vm330, %v362
        %366 = vrot.lane.b32.xlu0 %v323, 80
        %v367 = vpop.permute.xlu0 %366
        %s369 = scalar_lea.vmem %s257, 16 [#allocation8]
        %370 = vst.msk [vmem:[%s369] sm:$0xff] %vm336, %v367
        %371 = vrot.lane.b32.xlu0 %v323, 48
        %v372 = vpop.permute.xlu0 %371
        %s374 = scalar_lea.vmem %s257, 48 [#allocation8]
        %375 = vst.msk [vmem:[%s374] sm:$0xff] %vm336, %v372
        %376 = vrot.lane.b32.xlu0 %v345, 104
        %v377 = vpop.permute.xlu0 %376
        %s379 = scalar_lea.vmem %s250, 12 [#allocation7]
        %380 = vst.msk [vmem:[%s379] sm:$0xf] %vm330, %v377
        %381 = vrot.lane.b32.xlu0 %v323, 72
        %v382 = vpop.permute.xlu0 %381
        %s384 = scalar_lea.vmem %s257, 24 [#allocation8]
        %385 = vst.msk [vmem:[%s384] sm:$0xff] %vm336, %v382
        %386 = vrot.lane.b32.xlu0 %v323, 40
        %v387 = vpop.permute.xlu0 %386
        %s389 = scalar_lea.vmem %s257, 56 [#allocation8]
        %390 = vst.msk [vmem:[%s389] sm:$0xff] %vm336, %v387
        %s391 = sand.u32 %s118, 1
        %s392 = scalar_lea.sflag [#allocation4], %s391
        %s393 = sand.u32 %s118, 1
        %s394 = smul.addr %s393, 16
        %s395 = scalar_lea.vmem [#allocation7], %s394
        %s396 = sand.u32 %s146, 1
        %s397 = scalar_lea.sflag [#allocation9], %s396
        %s398 = sand.u32 %s146, 1
        %s399 = smul.addr %s398, 64
        %s400 = scalar_lea.vmem [#allocation8], %s399
        // Predicated region
        $region41: #{tpu_custom_call.1} parent=31 // pred_check
          %p401 = pneg %p128
        $region42: #{tpu_custom_call.1} parent=31 // pred_check_branch
          %403 = sbr.rel (%p401) target = $region44
        $region43: #{tpu_custom_call.1} parent=31 // pred_region
          %s405 = ssub.s32 256, 256
          %406 = vsyncadd %s392, %s405
          %s407 = smul.addr %s30, 4
          %s408 = sadd.s32 %s31, %s407
          %s409 = smul.addr %s408, 64
          %s410 = scalar_lea.hbm %s3, %s409
          %s411 = sshll.u32 %s395, 4
          %s412 = int_to_ptr.vmem [resolvable:$true] %s411
          %417 = dma.vmem_to_hbm [thread:$0]  %s412, 256, %s410, %s392, 64, 64, 4
        $region44: #{tpu_custom_call.1} parent=31 // pred_fallthru
          _
        // Predicated region
        $region45: #{tpu_custom_call.1} parent=31 // pred_check
          %p418 = pneg %p156
        $region46: #{tpu_custom_call.1} parent=31 // pred_check_branch
          %420 = sbr.rel (%p418) target = $region48
        $region47: #{tpu_custom_call.1} parent=31 // pred_region
          #allocation11 [shape = 'u32[6]{0}', space=smem, size = 0x18, scoped, tag = 'DMA stride descriptor']
          %s422 = ssub.s32 1024, 1024
          %423 = vsyncadd %s397, %s422
          %s424 = smul.addr %s30, 4
          %s425 = sadd.s32 %s31, %s424
          %s426 = smul.addr %s425, 128
          %s427 = scalar_lea.hbm %s4, %s426
          %s429 = sshll.u32 1, 14
          %s430 = sxor.u32 4294967295, %s429
          %s433 = sshll.u32 7, 18
          %s434 = sxor.u32 4294967295, %s433
          %s435 = sand.u32 0, %s434
          %s437 = sor.u32 %s435, 0
          %s438 = sshll.u32 %s400, 4
          %s439 = int_to_ptr.vmem [resolvable:$true] %s438
          %445 = sst [smem:[#allocation11]] 512
          %s446 = scalar_lea.smem [#allocation11], 1
          %447 = sst [smem:[%s446]] 1024
          %s448 = scalar_lea.smem [#allocation11], 2
          %449 = sst [smem:[%s448]] 4
          %s450 = scalar_lea.smem [#allocation11], 3
          %451 = sst [smem:[%s450]] 128
          %s452 = scalar_lea.smem [#allocation11], 4
          %453 = sst [smem:[%s452]] 128
          %s454 = scalar_lea.smem [#allocation11], 5
          %455 = sst [smem:[%s454]] 8
          %457 = dma.general %s439, 1024, %s427, %s397, 131072, [#allocation11], %s437, 0
        $region48: #{tpu_custom_call.1} parent=31 // pred_fallthru
          _
      $region32: #{tpu_custom_call.1} parent=5 // pred_fallthru
        _
      %p458 = scmp.le.s32.totalorder 2, %s21
      // Predicated region
      $region49: #{tpu_custom_call.1} parent=5 // pred_check
        %p459 = pneg %p458
      $region50: #{tpu_custom_call.1} parent=5 // pred_check_branch
        %461 = sbr.rel (%p459) target = $region52
      $region51: #{tpu_custom_call.1} parent=5 // pred_region
        %s462 = ssub.s32 %s21, 2
        // Predicated region
        $region53: #{tpu_custom_call.1} parent=51 // pred_check
          %p463 = pneg %p134
        $region54: #{tpu_custom_call.1} parent=51 // pred_check_branch
          %465 = sbr.rel (%p463) target = $region56
        $region55: #{tpu_custom_call.1} parent=51 // pred_region
          %s466 = sand.u32 %s119, 1
          %s467 = scalar_lea.sflag [#allocation4], %s466
          %s468 = sand.u32 %s119, 1
          %s469 = smul.addr %s468, 16
          %s470 = scalar_lea.vmem [#allocation7], %s469
          %471 = dma.done %s467, 256
        $region56: #{tpu_custom_call.1} parent=51 // pred_fallthru
          _
        // Predicated region
        $region57: #{tpu_custom_call.1} parent=51 // pred_check
          %p472 = pneg %p162
        $region58: #{tpu_custom_call.1} parent=51 // pred_check_branch
          %474 = sbr.rel (%p472) target = $region60
        $region59: #{tpu_custom_call.1} parent=51 // pred_region
          %s475 = sand.u32 %s147, 1
          %s476 = scalar_lea.sflag [#allocation9], %s475
          %s477 = sand.u32 %s147, 1
          %s478 = smul.addr %s477, 64
          %s479 = scalar_lea.vmem [#allocation8], %s478
          %480 = dma.done %s476, 1024
        $region60: #{tpu_custom_call.1} parent=51 // pred_fallthru
          _
      $region52: #{tpu_custom_call.1} parent=5 // pred_fallthru
        _
    $region6: #{tpu_custom_call.1} parent=1 // loop_footer
      %s25 = sadd.s32 1, %s21
    $region7: #{tpu_custom_call.1} parent=1 // loop_footer_branch
      %20 = sbr.rel target = $region3
    $region8: #{tpu_custom_call.1} parent=1 // loop_exit
      _
    %481 = vsyncpa [#allocation3], 1
    %s482 = scalar_lea.sflag [#allocation3], 1
    %483 = vsyncpa %s482, 1
    %484 = vsyncpa [#allocation6], 1
    %485 = vsyncpa [#allocation4], 1
    %s486 = scalar_lea.sflag [#allocation4], 1
    %487 = vsyncpa %s486, 1
    %488 = vsyncpa [#allocation9], 1
    %s489 = scalar_lea.sflag [#allocation9], 1
    %490 = vsyncpa %s489, 1

</llo_original>
